<compile_context>
chip_gen: v6e
topology: v6e:2x2x1
jax: 0.10.0
libtpu: 0.0.40
codegen_flags: <defaults>
</compile_context>

<pallas_src>
import jax
import jax.numpy as jnp
import numpy as np
from jax.experimental import pallas as pl
from jax.experimental.pallas import tpu as pltpu


def _make_dual_loss_kernel(top_N, dist_koef1, dist_koef2):
    def kernel(sent_idx_ref, asp_idx_ref, *refs):
        # scalar-prefetch refs are consumed by the index_maps only
        del sent_idx_ref, asp_idx_ref
        sent_refs = refs[:top_N]             # selected attentioned-sentence rows, (1,1,D) each
        aw_refs = refs[top_N:2 * top_N]      # matching aspect rows, (1,1,D) each
        out_ref = refs[2 * top_N]            # (1,1) f32 loss accumulator

        @pl.when(pl.program_id(0) == 0)
        def _init():
            out_ref[...] = jnp.zeros_like(out_ref)

        # l2norm of the selected rows only: x * rsqrt(sum(x^2) + 1e-10)
        s_hat = []
        for r in sent_refs:
            v = r[...].astype(jnp.float32)                    # (1,1,D)
            ss = jnp.sum(v * v, axis=-1, keepdims=True)       # (1,1,1)
            s_hat.append(v * jax.lax.rsqrt(ss + 1e-10))

        # distance_positive = dist_koef1 * mean_j ||s_hat_j - aw_j||^2
        dp = None
        for sh, ar in zip(s_hat, aw_refs):
            d = sh - ar[...].astype(jnp.float32)
            term = jnp.sum(d * d, axis=-1)                    # (1,1)
            dp = term if dp is None else dp + term
        dp = (dist_koef1 / top_N) * dp

        # distance_negative = dist_koef2 * ||s_hat_0 - s_hat_1||^2
        dneg = s_hat[0] - s_hat[1]
        dn = dist_koef2 * jnp.sum(dneg * dneg, axis=-1)       # (1,1)

        # loss_g = relu(1.0 + dp - dn)   (margin hardcoded to 1.0, as in torch)
        out_ref[...] += jnp.maximum(1.0 + dp - dn, 0.0)

    return kernel


def dual_loss(aw, attentioned_sent, aspect_probability, aspects=None, *,
              margin=1.0, top_N=2, dist_koef1=0.05, dist_koef2=1.0):
    """Pallas implementation of DualLoss.forward."""
    del aspects, margin   # unused by the reference forward()

    B, A, D = attentioned_sent.shape
    n_aspect_rows, D_aw = aw.shape
    assert D_aw == D
    assert (2 * B) % top_N == 0, "2*batch must be divisible by top_N"
    n_groups = (2 * B) // top_N

    # Per-sample top-2 aspects; the reference `top` only ever uses the first
    # two entries of each per-sample top-N list.
    _, top2 = jax.lax.top_k(aspect_probability, 2)            # (B, 2)
    top2 = top2.astype(jnp.int32)
    batch_ids = jnp.arange(B, dtype=jnp.int32)
    aspect_idx = jnp.concatenate([top2[:, 0], top2[:, 1]])    # (2B,)
    sent_row_idx = jnp.concatenate([batch_ids, batch_ids]) * A + aspect_idx  # rows of (B*A,)

    # Row views: keep the gathered row dim as a leading (blocked-by-1) axis so
    # the last two block dims equal the full array dims (TPU layout safe).
    sent_rows = attentioned_sent.reshape(B * A, 1, D)
    aw_rows = aw.reshape(n_aspect_rows, 1, D)

    def sent_spec(j):
        return pl.BlockSpec(
            (1, 1, D),
            lambda g, sent_idx, asp_idx: (sent_idx[g * top_N + j], 0, 0))

    def aw_spec(j):
        return pl.BlockSpec(
            (1, 1, D),
            lambda g, sent_idx, asp_idx: (asp_idx[g * top_N + j], 0, 0))

    grid_spec = pltpu.PrefetchScalarGridSpec(
        num_scalar_prefetch=2,
        grid=(n_groups,),
        in_specs=[sent_spec(j) for j in range(top_N)]
        + [aw_spec(j) for j in range(top_N)],
        out_specs=pl.BlockSpec((1, 1), lambda g, sent_idx, asp_idx: (0, 0)),
    )

    itemsize = np.dtype(attentioned_sent.dtype).itemsize
    cost = pl.CostEstimate(
        flops=int(n_groups * (6 * top_N + 3) * D),
        transcendentals=int(n_groups * top_N),
        bytes_accessed=int(2 * top_N * n_groups * D * itemsize + 2 * (2 * B) * 4 + 4),
    )

    loss = pl.pallas_call(
        _make_dual_loss_kernel(top_N, float(dist_koef1), float(dist_koef2)),
        out_shape=jax.ShapeDtypeStruct((1, 1), jnp.float32),
        grid_spec=grid_spec,
        compiler_params=pltpu.CompilerParams(
            dimension_semantics=("arbitrary",),   # output accumulated across the grid
            vmem_limit_bytes=32 * 1024 * 1024,
        ),
        cost_estimate=cost,
    )(sent_row_idx, aspect_idx, *([sent_rows] * top_N), *([aw_rows] * top_N))

    # torch.sum(x, -1, keepdims=True) on a 1-D tensor -> shape (1,)
    return loss.reshape(1)


def _reference_numpy(aw, attentioned_sent, aspect_probability, top_N,
                     dist_koef1, dist_koef2):
    """Literal numpy port of the PyTorch DualLoss.forward."""
    aw = np.asarray(aw, dtype=np.float32)
    sent = np.asarray(attentioned_sent, dtype=np.float32)
    prob = np.asarray(aspect_probability)
    D = sent.shape[-1]

    denom = np.sqrt(np.maximum(np.sum(sent ** 2, -1, keepdims=True), 0.0) + 1e-10)
    sent = sent / denom

    tmp_top = np.array([
        [(k, j[0]) for j in sorted(list(enumerate(sample)),
                                   key=lambda x: -x[1])[:top_N]]
        for k, sample in enumerate(prob)])
    top = np.concatenate([tmp_top[:, 0], tmp_top[:, 1]])

    sel = sent[top[:, 0], top[:, 1]]
    sel_g = sel.reshape(-1, top_N, D)
    aw_sel = aw[top[:, 1]]
    aw_g = aw_sel.reshape(-1, top_N, D)

    dp = dist_koef1 * ((sel_g - aw_g) ** 2).sum(-1).mean(1)
    dn = dist_koef2 * ((sel_g[:, 0] - sel_g[:, 1]) ** 2).sum(1)
    return np.sum(np.maximum(1.0 + dp - dn, 0.0), -1, keepdims=True)


if __name__ == "__main__":
    key = jax.random.PRNGKey(0)
    k1, k2, k3 = jax.random.split(key, 3)

    B, A, D = 8, 8, 32     # batch, n_aspects, hidden
    top_N = 2

    aw = jax.random.normal(k1, (A, D), dtype=jnp.float32)
    attentioned_sent = jax.random.normal(k2, (B, A, D), dtype=jnp.float32)
    aspect_probability = jax.nn.softmax(
        jax.random.normal(k3, (B, A), dtype=jnp.float32), axis=-1)

    loss = dual_loss(aw, attentioned_sent, aspect_probability, aspects=None,
                     margin=1.0, top_N=top_N)
    jax.block_until_ready(loss)

    ref = _reference_numpy(aw, attentioned_sent, aspect_probability,
                           top_N, 0.05, 1.0)
    assert loss.shape == (1,)
    assert np.allclose(np.asarray(loss), ref.reshape(1), atol=1e-4, rtol=1e-4), (loss, ref)

    print("KERNEL_OK")
</pallas_src>

<mosaic_0001>
module attributes {stable_mosaic.version = 11 : i64} {
  func.func @kernel(%arg0: i32, %arg1: memref<16xi32, #tpu.memory_space<smem>>, %arg2: memref<16xi32, #tpu.memory_space<smem>>, %arg3: memref<1x1x32xf32, #tpu.memory_space<vmem>>, %arg4: memref<1x1x32xf32, #tpu.memory_space<vmem>>, %arg5: memref<1x1x32xf32, #tpu.memory_space<vmem>>, %arg6: memref<1x1x32xf32, #tpu.memory_space<vmem>>, %arg7: memref<1x1xf32, #tpu.memory_space<vmem>>) attributes {dimension_semantics = [#tpu.dimension_semantics<arbitrary>], iteration_bounds = array<i64: 8>, scalar_prefetch = 2 : i64, scratch_operands = 0 : i64, tpu.core_type = #tpu.core_type<tc>, window_params = [{transform_indices = @transform_0, window_bounds = array<i64: 1, 1, 32>}, {transform_indices = @transform_1, window_bounds = array<i64: 1, 1, 32>}, {transform_indices = @transform_2, window_bounds = array<i64: 1, 1, 32>}, {transform_indices = @transform_3, window_bounds = array<i64: 1, 1, 32>}, {pipeline_mode = #tpu.pipeline_mode<synchronous>, transform_indices = @transform_4, window_bounds = array<i64: 1, 1>}]} {
    %c0_i32 = arith.constant 0 : i32
    %0 = arith.cmpi eq, %arg0, %c0_i32 : i32
    %1 = arith.extui %0 : i1 to i32
    %c0_i32_0 = arith.constant 0 : i32
    %2 = arith.cmpi ne, %1, %c0_i32_0 : i32
    scf.if %2 {
      %cst_26 = arith.constant 0.000000e+00 : f32
      %45 = vector.broadcast %cst_26 : f32 to vector<1x1xf32>
      %c0_27 = arith.constant 0 : index
      %c0_28 = arith.constant 0 : index
      %46 = vector.load %arg7[%c0_27, %c0_28] : memref<1x1xf32, #tpu.memory_space<vmem>>, vector<1x1xf32>
      tpu.vector_store %arg7[%c0_27, %c0_28], %45 {strides = array<i32>} : memref<1x1xf32, #tpu.memory_space<vmem>>, vector<1x1xf32>,
    } else {
    }
    %c0 = arith.constant 0 : index
    %c0_1 = arith.constant 0 : index
    %c0_2 = arith.constant 0 : index
    %3 = vector.load %arg3[%c0, %c0_1, %c0_2] : memref<1x1x32xf32, #tpu.memory_space<vmem>>, vector<1x1x32xf32>
    %4 = arith.mulf %3, %3 : vector<1x1x32xf32>
    %cst = arith.constant dense<0.000000e+00> : vector<1x1xf32>
    %5 = vector.multi_reduction <add>, %4, %cst [2] : vector<1x1x32xf32> to vector<1x1xf32>
    %6 = vector.shape_cast %5 : vector<1x1xf32> to vector<1x1x1xf32>
    %cst_3 = arith.constant 1.000000e-10 : f32
    %7 = vector.broadcast %cst_3 : f32 to vector<1x1x1xf32>
    %8 = arith.addf %6, %7 : vector<1x1x1xf32>
    %9 = math.rsqrt %8 : vector<1x1x1xf32>
    %10 = vector.broadcast %9 : vector<1x1x1xf32> to vector<1x1x32xf32>
    %11 = arith.mulf %3, %10 : vector<1x1x32xf32>
    %c0_4 = arith.constant 0 : index
    %c0_5 = arith.constant 0 : index
    %c0_6 = arith.constant 0 : index
    %12 = vector.load %arg4[%c0_4, %c0_5, %c0_6] : memref<1x1x32xf32, #tpu.memory_space<vmem>>, vector<1x1x32xf32>
    %13 = arith.mulf %12, %12 : vector<1x1x32xf32>
    %cst_7 = arith.constant dense<0.000000e+00> : vector<1x1xf32>
    %14 = vector.multi_reduction <add>, %13, %cst_7 [2] : vector<1x1x32xf32> to vector<1x1xf32>
    %15 = vector.shape_cast %14 : vector<1x1xf32> to vector<1x1x1xf32>
    %cst_8 = arith.constant 1.000000e-10 : f32
    %16 = vector.broadcast %cst_8 : f32 to vector<1x1x1xf32>
    %17 = arith.addf %15, %16 : vector<1x1x1xf32>
    %18 = math.rsqrt %17 : vector<1x1x1xf32>
    %19 = vector.broadcast %18 : vector<1x1x1xf32> to vector<1x1x32xf32>
    %20 = arith.mulf %12, %19 : vector<1x1x32xf32>
    %c0_9 = arith.constant 0 : index
    %c0_10 = arith.constant 0 : index
    %c0_11 = arith.constant 0 : index
    %21 = vector.load %arg5[%c0_9, %c0_10, %c0_11] : memref<1x1x32xf32, #tpu.memory_space<vmem>>, vector<1x1x32xf32>
    %22 = arith.subf %11, %21 : vector<1x1x32xf32>
    %23 = arith.mulf %22, %22 : vector<1x1x32xf32>
    %cst_12 = arith.constant dense<0.000000e+00> : vector<1x1xf32>
    %24 = vector.multi_reduction <add>, %23, %cst_12 [2] : vector<1x1x32xf32> to vector<1x1xf32>
    %c0_13 = arith.constant 0 : index
    %c0_14 = arith.constant 0 : index
    %c0_15 = arith.constant 0 : index
    %25 = vector.load %arg6[%c0_13, %c0_14, %c0_15] : memref<1x1x32xf32, #tpu.memory_space<vmem>>, vector<1x1x32xf32>
    %26 = arith.subf %20, %25 : vector<1x1x32xf32>
    %27 = arith.mulf %26, %26 : vector<1x1x32xf32>
    %cst_16 = arith.constant dense<0.000000e+00> : vector<1x1xf32>
    %28 = vector.multi_reduction <add>, %27, %cst_16 [2] : vector<1x1x32xf32> to vector<1x1xf32>
    %29 = arith.addf %24, %28 : vector<1x1xf32>
    %cst_17 = arith.constant 2.500000e-02 : f32
    %30 = vector.broadcast %cst_17 : f32 to vector<1x1xf32>
    %31 = arith.mulf %30, %29 : vector<1x1xf32>
    %32 = arith.subf %11, %20 : vector<1x1x32xf32>
    %33 = arith.mulf %32, %32 : vector<1x1x32xf32>
    %cst_18 = arith.constant dense<0.000000e+00> : vector<1x1xf32>
    %34 = vector.multi_reduction <add>, %33, %cst_18 [2] : vector<1x1x32xf32> to vector<1x1xf32>
    %cst_19 = arith.constant 1.000000e+00 : f32
    %35 = vector.broadcast %cst_19 : f32 to vector<1x1xf32>
    %36 = arith.mulf %35, %34 : vector<1x1xf32>
    %c0_20 = arith.constant 0 : index
    %c0_21 = arith.constant 0 : index
    %37 = vector.load %arg7[%c0_20, %c0_21] : memref<1x1xf32, #tpu.memory_space<vmem>>, vector<1x1xf32>
    %cst_22 = arith.constant 1.000000e+00 : f32
    %38 = vector.broadcast %cst_22 : f32 to vector<1x1xf32>
    %39 = arith.addf %38, %31 : vector<1x1xf32>
    %40 = arith.subf %39, %36 : vector<1x1xf32>
    %cst_23 = arith.constant 0.000000e+00 : f32
    %41 = vector.broadcast %cst_23 : f32 to vector<1x1xf32>
    %42 = arith.maximumf %40, %41 : vector<1x1xf32>
    %43 = arith.addf %37, %42 : vector<1x1xf32>
    %c0_24 = arith.constant 0 : index
    %c0_25 = arith.constant 0 : index
    %44 = vector.load %arg7[%c0_24, %c0_25] : memref<1x1xf32, #tpu.memory_space<vmem>>, vector<1x1xf32>
    tpu.vector_store %arg7[%c0_24, %c0_25], %43 {strides = array<i32>} : memref<1x1xf32, #tpu.memory_space<vmem>>, vector<1x1xf32>,
    return
  }
  func.func @transform_0(%arg0: i32, %arg1: memref<16xi32, #tpu.memory_space<smem>>, %arg2: memref<16xi32, #tpu.memory_space<smem>>) -> (i32, i32, i32) {
    %c2_i32 = arith.constant 2 : i32
    %0 = arith.muli %arg0, %c2_i32 : i32
    %c0_i32 = arith.constant 0 : i32
    %1 = arith.addi %0, %c0_i32 : i32
    %2 = arith.index_cast %1 : i32 to index
    %3 = memref.load %arg1[%2] : memref<16xi32, #tpu.memory_space<smem>>
    %c0_i32_0 = arith.constant 0 : i32
    %c0_i32_1 = arith.constant 0 : i32
    %c0_i32_2 = arith.constant 0 : i32
    return %3, %c0_i32_0, %c0_i32_1 : i32, i32, i32
  }
  func.func @transform_1(%arg0: i32, %arg1: memref<16xi32, #tpu.memory_space<smem>>, %arg2: memref<16xi32, #tpu.memory_space<smem>>) -> (i32, i32, i32) {
    %c2_i32 = arith.constant 2 : i32
    %0 = arith.muli %arg0, %c2_i32 : i32
    %c1_i32 = arith.constant 1 : i32
    %1 = arith.addi %0, %c1_i32 : i32
    %2 = arith.index_cast %1 : i32 to index
    %3 = memref.load %arg1[%2] : memref<16xi32, #tpu.memory_space<smem>>
    %c0_i32 = arith.constant 0 : i32
    %c0_i32_0 = arith.constant 0 : i32
    %c0_i32_1 = arith.constant 0 : i32
    return %3, %c0_i32, %c0_i32_0 : i32, i32, i32
  }
  func.func @transform_2(%arg0: i32, %arg1: memref<16xi32, #tpu.memory_space<smem>>, %arg2: memref<16xi32, #tpu.memory_space<smem>>) -> (i32, i32, i32) {
    %c2_i32 = arith.constant 2 : i32
    %0 = arith.muli %arg0, %c2_i32 : i32
    %c0_i32 = arith.constant 0 : i32
    %1 = arith.addi %0, %c0_i32 : i32
    %2 = arith.index_cast %1 : i32 to index
    %3 = memref.load %arg2[%2] : memref<16xi32, #tpu.memory_space<smem>>
    %c0_i32_0 = arith.constant 0 : i32
    %c0_i32_1 = arith.constant 0 : i32
    %c0_i32_2 = arith.constant 0 : i32
    return %3, %c0_i32_0, %c0_i32_1 : i32, i32, i32
  }
  func.func @transform_3(%arg0: i32, %arg1: memref<16xi32, #tpu.memory_space<smem>>, %arg2: memref<16xi32, #tpu.memory_space<smem>>) -> (i32, i32, i32) {
    %c2_i32 = arith.constant 2 : i32
    %0 = arith.muli %arg0, %c2_i32 : i32
    %c1_i32 = arith.constant 1 : i32
    %1 = arith.addi %0, %c1_i32 : i32
    %2 = arith.index_cast %1 : i32 to index
    %3 = memref.load %arg2[%2] : memref<16xi32, #tpu.memory_space<smem>>
    %c0_i32 = arith.constant 0 : i32
    %c0_i32_0 = arith.constant 0 : i32
    %c0_i32_1 = arith.constant 0 : i32
    return %3, %c0_i32, %c0_i32_0 : i32, i32, i32
  }
  func.func @transform_4(%arg0: i32, %arg1: memref<16xi32, #tpu.memory_space<smem>>, %arg2: memref<16xi32, #tpu.memory_space<smem>>) -> (i32, i32) {
    %c0_i32 = arith.constant 0 : i32
    %c0_i32_0 = arith.constant 0 : i32
    %c0_i32_1 = arith.constant 0 : i32
    return %c0_i32, %c0_i32_0 : i32, i32
  }
}

</mosaic_0001>

<llo_original>
// kernel: tpu_custom_call.1
$region0: #{tpu_custom_call.1}
  #allocation0 [shape = 'u32[]', space=smem, size = 0x4, offset = 0x4, fixed_abs, tag = 'smem constant byte address 0x4 - core index']
  #allocation1 [shape = 'u32[144,128]{1,0:T(1,128)}', space=vmem, size = 0x12000, scoped, tag = 'internal scratch']
  #allocation2 [shape = 's32[1]{0}', space=sflag, size = 0x4, scoped, tag = 'scoped memory for tpu_custom_call.1']
  #allocation3 [shape = 'u8[512]{0}', space=smem, size = 0x200, scoped, tag = 'prefetched SMEM operand 0']
  #allocation4 [shape = 'u8[512]{0}', space=smem, size = 0x200, scoped, tag = 'prefetched SMEM operand 1']
  %s0 = inlined_call_operand.vmem [shape: s32[16], index: 0, kind: input, shape index: {}]
  %s1 = inlined_call_operand.vmem [shape: s32[16], index: 1, kind: input, shape index: {}]
  %s2 = inlined_call_operand.vmem [shape: f32[64,1,32], index: 2, kind: input, shape index: {}]
  %s3 = inlined_call_operand.vmem [shape: f32[64,1,32], index: 3, kind: input, shape index: {}]
  %s4 = inlined_call_operand.vmem [shape: f32[8,1,32], index: 4, kind: input, shape index: {}]
  %s5 = inlined_call_operand.vmem [shape: f32[8,1,32], index: 5, kind: input, shape index: {}]
  %s6 = inlined_call_operand.hbm [shape: f32[1,1], index: 6, kind: output, shape index: {}]
  %s7 = sld [smem:[#allocation0]]
  $region53: #{tpu_custom_call.1} parent=0
    _
  %s9 = ssub.s32 1, %s7
  %s10 = scalar_select 0, %s9, %s7
  %s11 = sshll.u32 %s0, 4
  %s12 = int_to_ptr.vmem [resolvable:$true] %s11
  %14 = dma.vmem_to_smem %s12, 16, [#allocation3], [#allocation2]
  %s15 = sshll.u32 %s1, 4
  %s16 = int_to_ptr.vmem [resolvable:$true] %s15
  %18 = dma.vmem_to_smem %s16, 16, [#allocation4], [#allocation2]
  %19 = dma.done [#allocation2], 32
  %20 = sfence
  $region1: #{tpu_custom_call.1} parent=0
    #allocation5 [shape = 'u8[512]{0}', space=vmem, size = 0x400, scoped, tag = 'output window, operand 0, single buffered']
    #allocation6 [shape = 's32[2]{0}', space=sflag, size = 0x8, scoped, tag = 'scoped memory for tpu_custom_call.1']
    %21 = vsyncpa [#allocation6], 0
    loop: start=0, step=1, limit=10
    $region2: #{tpu_custom_call.1} parent=1 // loop_pre_header
      _
    $region3: #{tpu_custom_call.1} parent=1 // loop_header
      %s23 = sphi 0, %s27
      %p24 = scmp.ge.s32.totalorder %s23, 10
      %s37 = sphi 0, %s39
      %s40 = sphi 0, %s37
      %s41 = sphi 0, %s40
      %s57 = sphi 0, %s41
      %s69 = sphi 0, %s71
      %s72 = sphi 0, %s69
      %s73 = sphi 0, %s72
      %s89 = sphi 0, %s73
      %s99 = sphi 0, %s101
      %s102 = sphi 0, %s99
      %s103 = sphi 0, %s102
      %s119 = sphi 0, %s103
      %s131 = sphi 0, %s133
      %s134 = sphi 0, %s131
      %s135 = sphi 0, %s134
      %s151 = sphi 0, %s135
      %s155 = sphi 0, %s155
      %s157 = sphi 0, %s155
      %s158 = sphi 0, %s157
      %s172 = sphi 0, %s158
    $region4: #{tpu_custom_call.1} parent=1 // loop_header_branch
      %26 = sbr.rel (%p24) target = $region8
    $region5: #{tpu_custom_call.1} parent=1 // loop_body
      %s28 = ssub.s32 %s23, 1
      %s29 = ssub.s32 %s23, 2
      %s30 = sadd.s32 %s23, 1
      %s31 = smul.u32 %s23, 2
      %s32 = sld [smem:[#allocation3 + %s31]]
      %s33 = smul.u32 %s30, 2
      %s34 = sld [smem:[#allocation3 + %s33]]
      %s35 = ssub.s32 %s32, %s34
      %p36 = scmp.eq.s32.totalorder %s35, 0
      %s38 = sadd.s32 %s37, 1
      %s39 = scalar_select %p36, %s37, %s38
      %p42 = pneg %p36
      %p43 = scmp.eq.s32.totalorder %s23, 7
      %p44 = por %p42, %p43
      %p45 = scmp.ne.s32.totalorder %s37, %s40
      %p46 = scmp.eq.s32.totalorder %s23, 0
      %p47 = por %p45, %p46
      %p48 = scmp.ne.s32.totalorder %s37, %s40
      %p49 = scmp.eq.s32.totalorder %s28, 7
      %p50 = por %p48, %p49
      %p51 = scmp.ne.s32.totalorder %s40, %s41
      %p52 = scmp.eq.s32.totalorder %s28, 0
      %p53 = por %p51, %p52
      %p54 = scmp.ne.s32.totalorder %s40, %s41
      %p55 = scmp.eq.s32.totalorder %s29, 7
      %p56 = por %p54, %p55
      %p58 = scmp.ne.s32.totalorder %s41, %s57
      %p59 = scmp.eq.s32.totalorder %s29, 0
      %p60 = por %p58, %p59
      %s61 = smul.u32 %s23, 2
      %s62 = sadd.s32 %s61, 1
      %s63 = sld [smem:[#allocation3 + %s62]]
      %s64 = smul.u32 %s30, 2
      %s65 = sadd.s32 %s64, 1
      %s66 = sld [smem:[#allocation3 + %s65]]
      %s67 = ssub.s32 %s63, %s66
      %p68 = scmp.eq.s32.totalorder %s67, 0
      %s70 = sadd.s32 %s69, 1
      %s71 = scalar_select %p68, %s69, %s70
      %p74 = pneg %p68
      %p75 = scmp.eq.s32.totalorder %s23, 7
      %p76 = por %p74, %p75
      %p77 = scmp.ne.s32.totalorder %s69, %s72
      %p78 = scmp.eq.s32.totalorder %s23, 0
      %p79 = por %p77, %p78
      %p80 = scmp.ne.s32.totalorder %s69, %s72
      %p81 = scmp.eq.s32.totalorder %s28, 7
      %p82 = por %p80, %p81
      %p83 = scmp.ne.s32.totalorder %s72, %s73
      %p84 = scmp.eq.s32.totalorder %s28, 0
      %p85 = por %p83, %p84
      %p86 = scmp.ne.s32.totalorder %s72, %s73
      %p87 = scmp.eq.s32.totalorder %s29, 7
      %p88 = por %p86, %p87
      %p90 = scmp.ne.s32.totalorder %s73, %s89
      %p91 = scmp.eq.s32.totalorder %s29, 0
      %p92 = por %p90, %p91
      %s93 = smul.u32 %s23, 2
      %s94 = sld [smem:[#allocation4 + %s93]]
      %s95 = smul.u32 %s30, 2
      %s96 = sld [smem:[#allocation4 + %s95]]
      %s97 = ssub.s32 %s94, %s96
      %p98 = scmp.eq.s32.totalorder %s97, 0
      %s100 = sadd.s32 %s99, 1
      %s101 = scalar_select %p98, %s99, %s100
      %p104 = pneg %p98
      %p105 = scmp.eq.s32.totalorder %s23, 7
      %p106 = por %p104, %p105
      %p107 = scmp.ne.s32.totalorder %s99, %s102
      %p108 = scmp.eq.s32.totalorder %s23, 0
      %p109 = por %p107, %p108
      %p110 = scmp.ne.s32.totalorder %s99, %s102
      %p111 = scmp.eq.s32.totalorder %s28, 7
      %p112 = por %p110, %p111
      %p113 = scmp.ne.s32.totalorder %s102, %s103
      %p114 = scmp.eq.s32.totalorder %s28, 0
      %p115 = por %p113, %p114
      %p116 = scmp.ne.s32.totalorder %s102, %s103
      %p117 = scmp.eq.s32.totalorder %s29, 7
      %p118 = por %p116, %p117
      %p120 = scmp.ne.s32.totalorder %s103, %s119
      %p121 = scmp.eq.s32.totalorder %s29, 0
      %p122 = por %p120, %p121
      %s123 = smul.u32 %s23, 2
      %s124 = sadd.s32 %s123, 1
      %s125 = sld [smem:[#allocation4 + %s124]]
      %s126 = smul.u32 %s30, 2
      %s127 = sadd.s32 %s126, 1
      %s128 = sld [smem:[#allocation4 + %s127]]
      %s129 = ssub.s32 %s125, %s128
      %p130 = scmp.eq.s32.totalorder %s129, 0
      %s132 = sadd.s32 %s131, 1
      %s133 = scalar_select %p130, %s131, %s132
      %p136 = pneg %p130
      %p137 = scmp.eq.s32.totalorder %s23, 7
      %p138 = por %p136, %p137
      %p139 = scmp.ne.s32.totalorder %s131, %s134
      %p140 = scmp.eq.s32.totalorder %s23, 0
      %p141 = por %p139, %p140
      %p142 = scmp.ne.s32.totalorder %s131, %s134
      %p143 = scmp.eq.s32.totalorder %s28, 7
      %p144 = por %p142, %p143
      %p145 = scmp.ne.s32.totalorder %s134, %s135
      %p146 = scmp.eq.s32.totalorder %s28, 0
      %p147 = por %p145, %p146
      %p148 = scmp.ne.s32.totalorder %s134, %s135
      %p149 = scmp.eq.s32.totalorder %s29, 7
      %p150 = por %p148, %p149
      %p152 = scmp.ne.s32.totalorder %s135, %s151
      %p153 = scmp.eq.s32.totalorder %s29, 0
      %p154 = por %p152, %p153
      %s156 = sadd.s32 %s155, 1
      %p159 = scmp.eq.s32.totalorder %s23, 7
      %p160 = scmp.ne.s32.totalorder %s155, %s157
      %p161 = scmp.eq.s32.totalorder %s23, 0
      %p162 = por %p160, %p161
      %p163 = scmp.ne.s32.totalorder %s155, %s157
      %p164 = scmp.eq.s32.totalorder %s28, 7
      %p165 = por %p163, %p164
      %p166 = scmp.ne.s32.totalorder %s157, %s158
      %p167 = scmp.eq.s32.totalorder %s28, 0
      %p168 = por %p166, %p167
      %p169 = scmp.ne.s32.totalorder %s157, %s158
      %p170 = scmp.eq.s32.totalorder %s29, 7
      %p171 = por %p169, %p170
      %p173 = scmp.ne.s32.totalorder %s158, %s172
      %p174 = scmp.eq.s32.totalorder %s29, 0
      %p175 = por %p173, %p174
      %p176 = scmp.le.s32.totalorder 1, %s23
      %p177 = scmp.lt.s32.totalorder %s23, 9
      %p178 = pnand %p176, %p177
      %p179 = pneg %p178
      // Predicated region
      $region9: #{tpu_custom_call.1} parent=5 // pred_check
        _
      $region10: #{tpu_custom_call.1} parent=5 // pred_check_branch
        %181 = sbr.rel (%p178) target = $region12
      $region11: #{tpu_custom_call.1} parent=5 // pred_region
        %s182 = ssub.s32 %s23, 1
      $region12: #{tpu_custom_call.1} parent=5 // pred_fallthru
        _
      %p183 = scmp.lt.s32.totalorder %s23, 8
      // Predicated region
      $region13: #{tpu_custom_call.1} parent=5 // pred_check
        %p184 = pneg %p183
      $region14: #{tpu_custom_call.1} parent=5 // pred_check_branch
        %186 = sbr.rel (%p184) target = $region16
      $region15: #{tpu_custom_call.1} parent=5 // pred_region
        // Predicated region
        $region17: #{tpu_custom_call.1} parent=15 // pred_check
          %p187 = pneg %p47
        $region18: #{tpu_custom_call.1} parent=15 // pred_check_branch
          %189 = sbr.rel (%p187) target = $region20
        $region19: #{tpu_custom_call.1} parent=15 // pred_region
          %s190 = smul.u32 %s23, 2
          %s191 = sld [smem:[#allocation3 + %s190]]
          %p192 = scmp.lt.s32.totalorder %s191, 63
          %s193 = scalar_select %p192, %s191, 63
          %s194 = scalar_lea.vmem %s2, %s193
          %s195 = smul.u32 %s23, 2
          %s196 = sld [smem:[#allocation3 + %s195]]
        $region20: #{tpu_custom_call.1} parent=15 // pred_fallthru
          _
        // Predicated region
        $region21: #{tpu_custom_call.1} parent=15 // pred_check
          %p197 = pneg %p79
        $region22: #{tpu_custom_call.1} parent=15 // pred_check_branch
          %199 = sbr.rel (%p197) target = $region24
        $region23: #{tpu_custom_call.1} parent=15 // pred_region
          %s200 = smul.u32 %s23, 2
          %s201 = sadd.s32 %s200, 1
          %s202 = sld [smem:[#allocation3 + %s201]]
          %p203 = scmp.lt.s32.totalorder %s202, 63
          %s204 = scalar_select %p203, %s202, 63
          %s205 = scalar_lea.vmem %s3, %s204
          %s206 = smul.u32 %s23, 2
          %s207 = sadd.s32 %s206, 1
          %s208 = sld [smem:[#allocation3 + %s207]]
        $region24: #{tpu_custom_call.1} parent=15 // pred_fallthru
          _
        // Predicated region
        $region25: #{tpu_custom_call.1} parent=15 // pred_check
          %p209 = pneg %p109
        $region26: #{tpu_custom_call.1} parent=15 // pred_check_branch
          %211 = sbr.rel (%p209) target = $region28
        $region27: #{tpu_custom_call.1} parent=15 // pred_region
          %s212 = smul.u32 %s23, 2
          %s213 = sld [smem:[#allocation4 + %s212]]
          %p214 = scmp.lt.s32.totalorder %s213, 7
          %s215 = scalar_select %p214, %s213, 7
          %s216 = scalar_lea.vmem %s4, %s215
          %s217 = smul.u32 %s23, 2
          %s218 = sld [smem:[#allocation4 + %s217]]
        $region28: #{tpu_custom_call.1} parent=15 // pred_fallthru
          _
        // Predicated region
        $region29: #{tpu_custom_call.1} parent=15 // pred_check
          %p219 = pneg %p141
        $region30: #{tpu_custom_call.1} parent=15 // pred_check_branch
          %221 = sbr.rel (%p219) target = $region32
        $region31: #{tpu_custom_call.1} parent=15 // pred_region
          %s222 = smul.u32 %s23, 2
          %s223 = sadd.s32 %s222, 1
          %s224 = sld [smem:[#allocation4 + %s223]]
          %p225 = scmp.lt.s32.totalorder %s224, 7
          %s226 = scalar_select %p225, %s224, 7
          %s227 = scalar_lea.vmem %s5, %s226
          %s228 = smul.u32 %s23, 2
          %s229 = sadd.s32 %s228, 1
          %s230 = sld [smem:[#allocation4 + %s229]]
        $region32: #{tpu_custom_call.1} parent=15 // pred_fallthru
          _
      $region16: #{tpu_custom_call.1} parent=5 // pred_fallthru
        _
      %p231 = scmp.le.s32.totalorder 1, %s23
      %p232 = scmp.lt.s32.totalorder %s23, 9
      %p233 = pnand %p231, %p232
      %p234 = pneg %p233
      // Predicated region
      $region33: #{tpu_custom_call.1} parent=5 // pred_check
        _
      $region34: #{tpu_custom_call.1} parent=5 // pred_check_branch
        %236 = sbr.rel (%p233) target = $region36
      $region35: #{tpu_custom_call.1} parent=5 // pred_region
        %s237 = ssub.s32 %s23, 1
        %s238 = smul.u32 %s28, 2
        %s239 = sld [smem:[#allocation3 + %s238]]
        %p240 = scmp.lt.s32.totalorder %s239, 63
        %s241 = scalar_select %p240, %s239, 63
        %s242 = scalar_lea.vmem %s2, %s241
        %p243 = pneg %p53
        %p244 = pneg %p50
        %s245 = smul.u32 %s28, 2
        %s246 = sadd.s32 %s245, 1
        %s247 = sld [smem:[#allocation3 + %s246]]
        %p248 = scmp.lt.s32.totalorder %s247, 63
        %s249 = scalar_select %p248, %s247, 63
        %s250 = scalar_lea.vmem %s3, %s249
        %p251 = pneg %p85
        %p252 = pneg %p82
        %s253 = smul.u32 %s28, 2
        %s254 = sld [smem:[#allocation4 + %s253]]
        %p255 = scmp.lt.s32.totalorder %s254, 7
        %s256 = scalar_select %p255, %s254, 7
        %s257 = scalar_lea.vmem %s4, %s256
        %p258 = pneg %p115
        %p259 = pneg %p112
        %s260 = smul.u32 %s28, 2
        %s261 = sadd.s32 %s260, 1
        %s262 = sld [smem:[#allocation4 + %s261]]
        %p263 = scmp.lt.s32.totalorder %s262, 7
        %s264 = scalar_select %p263, %s262, 7
        %s265 = scalar_lea.vmem %s5, %s264
        %p266 = pneg %p147
        %p267 = pneg %p144
        %p268 = pneg %p168
        %p269 = pneg %p165
        %s270 = smul.u32 %s28, 2
        %s271 = sld [smem:[#allocation3 + %s270]]
        %p272 = scmp.lt.s32.totalorder %s271, 63
        %s273 = scalar_select %p272, %s271, 63
        %s274 = scalar_lea.vmem %s2, %s273
        %s275 = smul.u32 %s28, 2
        %s276 = sld [smem:[#allocation3 + %s275]]
        %s277 = smul.u32 %s28, 2
        %s278 = sadd.s32 %s277, 1
        %s279 = sld [smem:[#allocation3 + %s278]]
        %p280 = scmp.lt.s32.totalorder %s279, 63
        %s281 = scalar_select %p280, %s279, 63
        %s282 = scalar_lea.vmem %s3, %s281
        %s283 = smul.u32 %s28, 2
        %s284 = sadd.s32 %s283, 1
        %s285 = sld [smem:[#allocation3 + %s284]]
        %s286 = smul.u32 %s28, 2
        %s287 = sld [smem:[#allocation4 + %s286]]
        %p288 = scmp.lt.s32.totalorder %s287, 7
        %s289 = scalar_select %p288, %s287, 7
        %s290 = scalar_lea.vmem %s4, %s289
        %s291 = smul.u32 %s28, 2
        %s292 = sld [smem:[#allocation4 + %s291]]
        %s293 = smul.u32 %s28, 2
        %s294 = sadd.s32 %s293, 1
        %s295 = sld [smem:[#allocation4 + %s294]]
        %p296 = scmp.lt.s32.totalorder %s295, 7
        %s297 = scalar_select %p296, %s295, 7
        %s298 = scalar_lea.vmem %s5, %s297
        %s299 = smul.u32 %s28, 2
        %s300 = sadd.s32 %s299, 1
        %s301 = sld [smem:[#allocation4 + %s300]]
        %p302 = scmp.eq.s32.totalorder %s28, 0
        // Predicated region
        $region37: #{tpu_custom_call.1} parent=35 // pred_check
          %p303 = pneg %p302
        $region38: #{tpu_custom_call.1} parent=35 // pred_check_branch
          %305 = sbr.rel (%p303) target = $region40
        $region39: #{tpu_custom_call.1} parent=35 // pred_region
          %vm306 = vcmask 0
          %307 = vst.msk [vmem:[#allocation5] sm:$0x1] %vm306, 0.0
        $region40: #{tpu_custom_call.1} parent=35 // pred_fallthru
          _
        %v308 = vld [vmem:[%s274] sm:$0x1]
        %v309 = vmul.f32 %v308, %v308
        %vm310 = vcmask 253952
        %v311 = vsel %vm310, %v309, 0.0
        %312 = vadd.xlane.f32.xlu0 %v311
        %v313 = vpop.xlane.xlu0 %312
        %v314 = vadd.f32 %v313, 1e-10
        %v315 = vrsqrt.pop %v314
        %v316 = vmul.f32 %v308, %v315
        %v317 = vld [vmem:[%s282] sm:$0x1]
        %v318 = vmul.f32 %v317, %v317
        %v319 = vsel %vm310, %v318, 0.0
        %320 = vadd.xlane.f32.xlu0 %v319
        %v321 = vpop.xlane.xlu0 %320
        %v322 = vadd.f32 %v321, 1e-10
        %v323 = vrsqrt.pop %v322
        %v324 = vmul.f32 %v317, %v323
        %v325 = vld [vmem:[%s290] sm:$0x1]
        %v326 = vsub.f32 %v316, %v325
        %v327 = vmul.f32 %v326, %v326
        %v328 = vsel %vm310, %v327, 0.0
        %329 = vadd.xlane.f32.xlu0 %v328
        %v330 = vpop.xlane.xlu0 %329
        %v331 = vld [vmem:[%s298] sm:$0x1]
        %v332 = vsub.f32 %v324, %v331
        %v333 = vmul.f32 %v332, %v332
        %v334 = vsel %vm310, %v333, 0.0
        %335 = vadd.xlane.f32.xlu0 %v334
        %v336 = vpop.xlane.xlu0 %335
        %v337 = vadd.f32 %v330, %v336
        %v338 = vmul.f32 %v337, 0.025
        %v339 = vsub.f32 %v316, %v324
        %v340 = vmul.f32 %v339, %v339
        %v341 = vsel %vm310, %v340, 0.0
        %342 = vadd.xlane.f32.xlu0 %v341
        %v343 = vpop.xlane.xlu0 %342
        %v344 = vld [vmem:[#allocation5] sm:$0x1]
        %v345 = vadd.f32 %v338, 1.0
        %v346 = vsub.f32 %v345, %v343
        %v347 = vmax.f32 %v346, 0.0
        %v348 = vadd.f32 %v344, %v347
        %vm349 = vcmask 0
        %350 = vst.msk [vmem:[#allocation5] sm:$0x1] %vm349, %v348
        // Predicated region
        $region41: #{tpu_custom_call.1} parent=35 // pred_check
          %p351 = pneg %p165
        $region42: #{tpu_custom_call.1} parent=35 // pred_check_branch
          %353 = sbr.rel (%p351) target = $region44
        $region43: #{tpu_custom_call.1} parent=35 // pred_region
          %s355 = ssub.s32 16, 16
          %356 = vsyncadd [#allocation6], %s355
          %s358 = sshll.u32 [#allocation5], 4
          %s359 = int_to_ptr.vmem [resolvable:$true] %s358
          %361 = dma.vmem_to_hbm [thread:$0]  %s359, 16, %s6, [#allocation6]
        $region44: #{tpu_custom_call.1} parent=35 // pred_fallthru
          _
        // Predicated region
        $region45: #{tpu_custom_call.1} parent=35 // pred_check
          %p362 = pneg %p165
        $region46: #{tpu_custom_call.1} parent=35 // pred_check_branch
          %364 = sbr.rel (%p362) target = $region48
        $region47: #{tpu_custom_call.1} parent=35 // pred_region
          %365 = dma.done [#allocation6], 16
        $region48: #{tpu_custom_call.1} parent=35 // pred_fallthru
          _
      $region36: #{tpu_custom_call.1} parent=5 // pred_fallthru
        _
      %p366 = scmp.le.s32.totalorder 2, %s23
      // Predicated region
      $region49: #{tpu_custom_call.1} parent=5 // pred_check
        %p367 = pneg %p366
      $region50: #{tpu_custom_call.1} parent=5 // pred_check_branch
        %369 = sbr.rel (%p367) target = $region52
      $region51: #{tpu_custom_call.1} parent=5 // pred_region
        %s370 = ssub.s32 %s23, 2
      $region52: #{tpu_custom_call.1} parent=5 // pred_fallthru
        _
    $region6: #{tpu_custom_call.1} parent=1 // loop_footer
      %s27 = sadd.s32 1, %s23
    $region7: #{tpu_custom_call.1} parent=1 // loop_footer_branch
      %22 = sbr.rel target = $region3
    $region8: #{tpu_custom_call.1} parent=1 // loop_exit
      _
    %371 = vsyncpa [#allocation6], 1
    %s372 = scalar_lea.sflag [#allocation6], 1
    %373 = vsyncpa %s372, 1

</llo_original>
